<compile_context>
chip_gen: v7x
topology: tpu7x:2x2x1
jax: 0.10.0
libtpu: 0.0.40
codegen_flags: <defaults>
</compile_context>

<pallas_src>
import functools

import jax
import jax.numpy as jnp
from jax.experimental import pallas as pl
from jax.experimental.pallas import tpu as pltpu

# ----------------------------- configuration --------------------------------
C_IN = 16          # input channel dimension (per rigid)
C_HIDDEN = 32      # hidden channel dimension
NO_BLOCKS = 2      # number of resnet blocks
NO_ANGLES = 7      # number of torsion angles
NO_RIGIDS = 2      # rigids folded into the feature dim
EPS = 1e-8

B = 2              # batch
N_RIGID = 8        # rigid bodies per batch element (divisible by NO_RIGIDS)

D_IN = C_IN * NO_RIGIDS        # 32  (features after folding rigids)
N_HALF = 8                     # no_angles (7) padded to 8 lanes per component

TM_CAP = 1024                  # max rows per grid step


def _round_up(x, k):
    return ((x + k - 1) // k) * k


# ------------------------------- kernel --------------------------------------
def _angle_resnet_kernel(no_blocks, eps,
                         s_ref, si_ref,
                         w_in_ref, b_in_ref,
                         w_blk_ref, b_blk_ref,
                         w_out_ref, b_out_ref,
                         out_a_ref, out_b_ref):
    f32 = jnp.float32

    # linear_in(relu(s)) + linear_initial(relu(s_initial)); biases pre-summed.
    a = jnp.dot(jnp.maximum(s_ref[...], 0.0), w_in_ref[0],
                preferred_element_type=f32)
    a = a + jnp.dot(jnp.maximum(si_ref[...], 0.0), w_in_ref[1],
                    preferred_element_type=f32)
    a = a + b_in_ref[...]

    # Resnet blocks (statically unrolled; no_blocks is small).
    for l in range(no_blocks):
        res = a
        h = jnp.maximum(a, 0.0)
        h = jnp.dot(h, w_blk_ref[2 * l], preferred_element_type=f32) + b_blk_ref[2 * l]
        h = jnp.maximum(h, 0.0)
        h = jnp.dot(h, w_blk_ref[2 * l + 1], preferred_element_type=f32) + b_blk_ref[2 * l + 1]
        a = res + h

    h = jnp.maximum(a, 0.0)

    # linear_out, de-interleaved host-side: column j of z_a / z_b is angle j's
    # x / y component.  The per-angle L2 normalization then needs no
    # cross-lane traffic (no pairing matmul, no lane rolls): pure VPU add,
    # EUP rsqrt, VPU multiply.  Padded lane 7 is exactly zero (zero weight
    # columns + zero bias) and is sliced off in the wrapper.
    z_a = jnp.dot(h, w_out_ref[0], preferred_element_type=f32) + b_out_ref[0]
    z_b = jnp.dot(h, w_out_ref[1], preferred_element_type=f32) + b_out_ref[1]

    inv = jax.lax.rsqrt(jnp.maximum(z_a * z_a + z_b * z_b, eps))
    out_a_ref[...] = z_a * inv
    out_b_ref[...] = z_b * inv


# ------------------------------- wrapper --------------------------------------
def angle_resnet_forward(s, s_initial, params):
    """s, s_initial: [B, N_rigid, c_in] float32.
    Returns [B, N_rigid // no_rigids, no_angles, 2]."""
    b, n_rigid, c_in = s.shape
    g = n_rigid // NO_RIGIDS
    m = b * g

    # Zero-copy row-major views; no concat, no pad of the inputs.
    s2d = s.reshape(m, D_IN)
    si2d = s_initial.reshape(m, D_IN)

    # Row tile: >= 2 grid steps whenever possible (v7x: 2 TensorCores),
    # capped at TM_CAP.  Partial final tiles are masked by Pallas on
    # writeback, so m is never padded.
    if m <= 8:
        tm = 8
    else:
        tm = min(TM_CAP, _round_up((m + 1) // 2, 8))
    grid = pl.cdiv(m, tm)

    # One-time host-side weight prep (tiny arrays).
    w_in_stk = jnp.stack([params["w_in"], params["w_initial"]], axis=0)      # [2, D_IN, H]
    b_in_sum = params["b_in"] + params["b_initial"]                          # [1, H]
    w_blk = jnp.stack([params["w1"], params["w2"]], axis=1).reshape(
        2 * NO_BLOCKS, C_HIDDEN, C_HIDDEN)                                   # [w1_0,w2_0,w1_1,w2_1,...]
    b_blk = jnp.stack([params["b1"], params["b2"]], axis=1).reshape(
        2 * NO_BLOCKS, 1, C_HIDDEN)
    # De-interleave linear_out into (x-component, y-component) halves,
    # each zero-padded 7 -> 8 output lanes.
    w_out = jnp.zeros((2, C_HIDDEN, N_HALF), jnp.float32)
    w_out = w_out.at[0, :, :NO_ANGLES].set(params["w_out"][:, 0::2])
    w_out = w_out.at[1, :, :NO_ANGLES].set(params["w_out"][:, 1::2])
    b_out = jnp.zeros((2, 1, N_HALF), jnp.float32)
    b_out = b_out.at[0, :, :NO_ANGLES].set(params["b_out"][:, 0::2])
    b_out = b_out.at[1, :, :NO_ANGLES].set(params["b_out"][:, 1::2])

    kernel = functools.partial(_angle_resnet_kernel, NO_BLOCKS, EPS)
    row_map = lambda i: (i, 0)
    const3 = lambda i: (0, 0, 0)
    const2 = lambda i: (0, 0)

    flops = int(m * (2 * 2 * D_IN * C_HIDDEN                      # input dots
                     + NO_BLOCKS * 2 * 2 * C_HIDDEN * C_HIDDEN    # block dots
                     + 2 * 2 * C_HIDDEN * N_HALF                  # output dots
                     + 16 * C_HIDDEN))                            # relu/add slack
    bytes_accessed = int(4 * (2 * m * D_IN + 2 * m * N_HALF
                              + w_in_stk.size + b_in_sum.size + w_blk.size
                              + b_blk.size + w_out.size + b_out.size))

    out_a, out_b = pl.pallas_call(
        kernel,
        out_shape=(jax.ShapeDtypeStruct((m, N_HALF), jnp.float32),
                   jax.ShapeDtypeStruct((m, N_HALF), jnp.float32)),
        grid_spec=pltpu.PrefetchScalarGridSpec(
            num_scalar_prefetch=0,
            grid=(grid,),
            in_specs=[
                pl.BlockSpec((tm, D_IN), row_map),                            # s rows
                pl.BlockSpec((tm, D_IN), row_map),                            # s_initial rows
                pl.BlockSpec((2, D_IN, C_HIDDEN), const3),                    # stacked W_in/W_init
                pl.BlockSpec((1, C_HIDDEN), const2),                          # summed bias
                pl.BlockSpec((2 * NO_BLOCKS, C_HIDDEN, C_HIDDEN), const3),    # stacked block W
                pl.BlockSpec((2 * NO_BLOCKS, 1, C_HIDDEN), const3),           # stacked block b
                pl.BlockSpec((2, C_HIDDEN, N_HALF), const3),                  # de-interleaved W_out
                pl.BlockSpec((2, 1, N_HALF), const3),                         # de-interleaved b_out
            ],
            out_specs=[
                pl.BlockSpec((tm, N_HALF), row_map),                          # x components
                pl.BlockSpec((tm, N_HALF), row_map),                          # y components
            ],
        ),
        compiler_params=pltpu.CompilerParams(
            dimension_semantics=("parallel",),
            vmem_limit_bytes=32 * 1024 * 1024,
        ),
        cost_estimate=pl.CostEstimate(flops=flops,
                                      transcendentals=int(m * N_HALF),
                                      bytes_accessed=bytes_accessed),
    )(s2d, si2d, w_in_stk, b_in_sum, w_blk, b_blk, w_out, b_out)

    # Tiny re-interleave of the (x, y) halves; drops the padded 8th lane.
    ang = jnp.stack([out_a[:, :NO_ANGLES], out_b[:, :NO_ANGLES]], axis=-1)   # [m, 7, 2]
    return ang.reshape(b, g, NO_ANGLES, 2)


# --------------------------- pure-JAX reference -------------------------------
def angle_resnet_reference(s, s_initial, params):
    b, n_rigid, c_in = s.shape
    g = n_rigid // NO_RIGIDS
    si = jax.nn.relu(s_initial.reshape(b, g, D_IN))
    si = si @ params["w_initial"] + params["b_initial"]
    a = jax.nn.relu(s.reshape(b, g, D_IN))
    a = a @ params["w_in"] + params["b_in"]
    a = a + si
    for l in range(NO_BLOCKS):
        res = a
        a = jax.nn.relu(a) @ params["w1"][l] + params["b1"][l]
        a = jax.nn.relu(a) @ params["w2"][l] + params["b2"][l]
        a = a + res
    z = jax.nn.relu(a) @ params["w_out"] + params["b_out"]
    z = z.reshape(b, g, NO_ANGLES, 2)
    denom = jnp.sqrt(jnp.clip(jnp.sum(z * z, axis=-1, keepdims=True), min=EPS))
    return z / denom


# --------------------------- deterministic params -----------------------------
def init_params(key):
    # Weights stored pre-transposed ([in, out]) vs. nn.Linear's [out, in],
    # so kernels can do x @ W directly.
    ks = jax.random.split(key, 12)
    D_OUT = NO_ANGLES * 2
    p = {
        "w_in":      0.1 * jax.random.normal(ks[0], (D_IN, C_HIDDEN), jnp.float32),
        "b_in":      0.1 * jax.random.normal(ks[1], (1, C_HIDDEN), jnp.float32),
        "w_initial": 0.1 * jax.random.normal(ks[2], (D_IN, C_HIDDEN), jnp.float32),
        "b_initial": 0.1 * jax.random.normal(ks[3], (1, C_HIDDEN), jnp.float32),
        "w1":        0.1 * jax.random.normal(ks[4], (NO_BLOCKS, C_HIDDEN, C_HIDDEN), jnp.float32),
        "b1":        0.1 * jax.random.normal(ks[5], (NO_BLOCKS, 1, C_HIDDEN), jnp.float32),
        "w2":        0.1 * jax.random.normal(ks[6], (NO_BLOCKS, C_HIDDEN, C_HIDDEN), jnp.float32),
        "b2":        0.1 * jax.random.normal(ks[7], (NO_BLOCKS, 1, C_HIDDEN), jnp.float32),
        "w_out":     0.1 * jax.random.normal(ks[8], (C_HIDDEN, D_OUT), jnp.float32),
        "b_out":     0.1 * jax.random.normal(ks[9], (1, D_OUT), jnp.float32),
    }
    return p


# ----------------------------------- main --------------------------------------
if __name__ == "__main__":
    key = jax.random.PRNGKey(0)
    k_s, k_si, k_p = jax.random.split(key, 3)

    s = jax.random.normal(k_s, (B, N_RIGID, C_IN), jnp.float32)
    s_initial = jax.random.normal(k_si, (B, N_RIGID, C_IN), jnp.float32)
    params = init_params(k_p)

    out = angle_resnet_forward(s, s_initial, params)
    out = jax.block_until_ready(out)

    ref = angle_resnet_reference(s, s_initial, params)
    assert out.shape == (B, N_RIGID // NO_RIGIDS, NO_ANGLES, 2), out.shape
    # rsqrt+multiply (vs sqrt+divide in the reference) changes rounding order
    # slightly -> 1e-4 tolerance.
    assert jnp.allclose(out, ref, atol=1e-4, rtol=1e-4), "mismatch vs. reference"

    print("KERNEL_OK")
</pallas_src>

<mosaic_0001>
module attributes {stable_mosaic.version = 11 : i64} {
  func.func @_angle_resnet_kernel(%arg0: i32, %arg1: memref<8x32xf32, #tpu.memory_space<vmem>>, %arg2: memref<8x32xf32, #tpu.memory_space<vmem>>, %arg3: memref<2x32x32xf32, #tpu.memory_space<vmem>>, %arg4: memref<1x32xf32, #tpu.memory_space<vmem>>, %arg5: memref<4x32x32xf32, #tpu.memory_space<vmem>>, %arg6: memref<4x1x32xf32, #tpu.memory_space<vmem>>, %arg7: memref<2x32x8xf32, #tpu.memory_space<vmem>>, %arg8: memref<2x1x8xf32, #tpu.memory_space<vmem>>, %arg9: memref<8x8xf32, #tpu.memory_space<vmem>>, %arg10: memref<8x8xf32, #tpu.memory_space<vmem>>) attributes {dimension_semantics = [#tpu.dimension_semantics<parallel>], iteration_bounds = array<i64: 1>, scalar_prefetch = 0 : i64, scratch_operands = 0 : i64, tpu.core_type = #tpu.core_type<tc>, window_params = [{transform_indices = @transform_0, window_bounds = array<i64: 8, 32>}, {transform_indices = @transform_1, window_bounds = array<i64: 8, 32>}, {pipeline_mode = #tpu.pipeline_mode<synchronous>, transform_indices = @transform_2, window_bounds = array<i64: 2, 32, 32>}, {pipeline_mode = #tpu.pipeline_mode<synchronous>, transform_indices = @transform_3, window_bounds = array<i64: 1, 32>}, {pipeline_mode = #tpu.pipeline_mode<synchronous>, transform_indices = @transform_4, window_bounds = array<i64: 4, 32, 32>}, {pipeline_mode = #tpu.pipeline_mode<synchronous>, transform_indices = @transform_5, window_bounds = array<i64: 4, 1, 32>}, {pipeline_mode = #tpu.pipeline_mode<synchronous>, transform_indices = @transform_6, window_bounds = array<i64: 2, 32, 8>}, {pipeline_mode = #tpu.pipeline_mode<synchronous>, transform_indices = @transform_7, window_bounds = array<i64: 2, 1, 8>}, {transform_indices = @transform_8, window_bounds = array<i64: 8, 8>}, {transform_indices = @transform_9, window_bounds = array<i64: 8, 8>}]} {
    %c0 = arith.constant 0 : index
    %c0_0 = arith.constant 0 : index
    %0 = vector.load %arg1[%c0, %c0_0] : memref<8x32xf32, #tpu.memory_space<vmem>>, vector<8x32xf32>
    %cst = arith.constant 0.000000e+00 : f32
    %1 = vector.broadcast %cst : f32 to vector<8x32xf32>
    %2 = arith.maximumf %0, %1 : vector<8x32xf32>
    %c0_1 = arith.constant 0 : index
    %c0_2 = arith.constant 0 : index
    %c0_3 = arith.constant 0 : index
    %3 = vector.load %arg3[%c0_1, %c0_2, %c0_3] : memref<2x32x32xf32, #tpu.memory_space<vmem>>, vector<1x32x32xf32>
    %4 = vector.shape_cast %3 : vector<1x32x32xf32> to vector<32x32xf32>
    %cst_4 = arith.constant dense<0.000000e+00> : vector<8x32xf32>
    %5 = tpu.matmul %2, %4, %cst_4 {dimension_numbers = #tpu.dot_dimension_numbers<[1], [0], [0], [1], [0, 0, 1, 1], [], []>} : vector<8x32xf32>, vector<32x32xf32>, vector<8x32xf32> -> vector<8x32xf32>
    %c0_5 = arith.constant 0 : index
    %c0_6 = arith.constant 0 : index
    %6 = vector.load %arg2[%c0_5, %c0_6] : memref<8x32xf32, #tpu.memory_space<vmem>>, vector<8x32xf32>
    %cst_7 = arith.constant 0.000000e+00 : f32
    %7 = vector.broadcast %cst_7 : f32 to vector<8x32xf32>
    %8 = arith.maximumf %6, %7 : vector<8x32xf32>
    %c1 = arith.constant 1 : index
    %c0_8 = arith.constant 0 : index
    %c0_9 = arith.constant 0 : index
    %9 = vector.load %arg3[%c1, %c0_8, %c0_9] : memref<2x32x32xf32, #tpu.memory_space<vmem>>, vector<1x32x32xf32>
    %10 = vector.shape_cast %9 : vector<1x32x32xf32> to vector<32x32xf32>
    %cst_10 = arith.constant dense<0.000000e+00> : vector<8x32xf32>
    %11 = tpu.matmul %8, %10, %cst_10 {dimension_numbers = #tpu.dot_dimension_numbers<[1], [0], [0], [1], [0, 0, 1, 1], [], []>} : vector<8x32xf32>, vector<32x32xf32>, vector<8x32xf32> -> vector<8x32xf32>
    %12 = arith.addf %5, %11 : vector<8x32xf32>
    %c0_11 = arith.constant 0 : index
    %c0_12 = arith.constant 0 : index
    %13 = vector.load %arg4[%c0_11, %c0_12] : memref<1x32xf32, #tpu.memory_space<vmem>>, vector<1x32xf32>
    %14 = vector.broadcast %13 : vector<1x32xf32> to vector<8x32xf32>
    %15 = arith.addf %12, %14 : vector<8x32xf32>
    %cst_13 = arith.constant 0.000000e+00 : f32
    %16 = vector.broadcast %cst_13 : f32 to vector<8x32xf32>
    %17 = arith.maximumf %15, %16 : vector<8x32xf32>
    %c0_14 = arith.constant 0 : index
    %c0_15 = arith.constant 0 : index
    %c0_16 = arith.constant 0 : index
    %18 = vector.load %arg5[%c0_14, %c0_15, %c0_16] : memref<4x32x32xf32, #tpu.memory_space<vmem>>, vector<1x32x32xf32>
    %19 = vector.shape_cast %18 : vector<1x32x32xf32> to vector<32x32xf32>
    %cst_17 = arith.constant dense<0.000000e+00> : vector<8x32xf32>
    %20 = tpu.matmul %17, %19, %cst_17 {dimension_numbers = #tpu.dot_dimension_numbers<[1], [0], [0], [1], [0, 0, 1, 1], [], []>} : vector<8x32xf32>, vector<32x32xf32>, vector<8x32xf32> -> vector<8x32xf32>
    %c0_18 = arith.constant 0 : index
    %c0_19 = arith.constant 0 : index
    %c0_20 = arith.constant 0 : index
    %21 = vector.load %arg6[%c0_18, %c0_19, %c0_20] : memref<4x1x32xf32, #tpu.memory_space<vmem>>, vector<1x1x32xf32>
    %22 = vector.shape_cast %21 : vector<1x1x32xf32> to vector<1x32xf32>
    %23 = vector.broadcast %22 : vector<1x32xf32> to vector<8x32xf32>
    %24 = arith.addf %20, %23 : vector<8x32xf32>
    %cst_21 = arith.constant 0.000000e+00 : f32
    %25 = vector.broadcast %cst_21 : f32 to vector<8x32xf32>
    %26 = arith.maximumf %24, %25 : vector<8x32xf32>
    %c1_22 = arith.constant 1 : index
    %c0_23 = arith.constant 0 : index
    %c0_24 = arith.constant 0 : index
    %27 = vector.load %arg5[%c1_22, %c0_23, %c0_24] : memref<4x32x32xf32, #tpu.memory_space<vmem>>, vector<1x32x32xf32>
    %28 = vector.shape_cast %27 : vector<1x32x32xf32> to vector<32x32xf32>
    %cst_25 = arith.constant dense<0.000000e+00> : vector<8x32xf32>
    %29 = tpu.matmul %26, %28, %cst_25 {dimension_numbers = #tpu.dot_dimension_numbers<[1], [0], [0], [1], [0, 0, 1, 1], [], []>} : vector<8x32xf32>, vector<32x32xf32>, vector<8x32xf32> -> vector<8x32xf32>
    %c1_26 = arith.constant 1 : index
    %c0_27 = arith.constant 0 : index
    %c0_28 = arith.constant 0 : index
    %30 = vector.load %arg6[%c1_26, %c0_27, %c0_28] : memref<4x1x32xf32, #tpu.memory_space<vmem>>, vector<1x1x32xf32>
    %31 = vector.shape_cast %30 : vector<1x1x32xf32> to vector<1x32xf32>
    %32 = vector.broadcast %31 : vector<1x32xf32> to vector<8x32xf32>
    %33 = arith.addf %29, %32 : vector<8x32xf32>
    %34 = arith.addf %15, %33 : vector<8x32xf32>
    %cst_29 = arith.constant 0.000000e+00 : f32
    %35 = vector.broadcast %cst_29 : f32 to vector<8x32xf32>
    %36 = arith.maximumf %34, %35 : vector<8x32xf32>
    %c2 = arith.constant 2 : index
    %c0_30 = arith.constant 0 : index
    %c0_31 = arith.constant 0 : index
    %37 = vector.load %arg5[%c2, %c0_30, %c0_31] : memref<4x32x32xf32, #tpu.memory_space<vmem>>, vector<1x32x32xf32>
    %38 = vector.shape_cast %37 : vector<1x32x32xf32> to vector<32x32xf32>
    %cst_32 = arith.constant dense<0.000000e+00> : vector<8x32xf32>
    %39 = tpu.matmul %36, %38, %cst_32 {dimension_numbers = #tpu.dot_dimension_numbers<[1], [0], [0], [1], [0, 0, 1, 1], [], []>} : vector<8x32xf32>, vector<32x32xf32>, vector<8x32xf32> -> vector<8x32xf32>
    %c2_33 = arith.constant 2 : index
    %c0_34 = arith.constant 0 : index
    %c0_35 = arith.constant 0 : index
    %40 = vector.load %arg6[%c2_33, %c0_34, %c0_35] : memref<4x1x32xf32, #tpu.memory_space<vmem>>, vector<1x1x32xf32>
    %41 = vector.shape_cast %40 : vector<1x1x32xf32> to vector<1x32xf32>
    %42 = vector.broadcast %41 : vector<1x32xf32> to vector<8x32xf32>
    %43 = arith.addf %39, %42 : vector<8x32xf32>
    %cst_36 = arith.constant 0.000000e+00 : f32
    %44 = vector.broadcast %cst_36 : f32 to vector<8x32xf32>
    %45 = arith.maximumf %43, %44 : vector<8x32xf32>
    %c3 = arith.constant 3 : index
    %c0_37 = arith.constant 0 : index
    %c0_38 = arith.constant 0 : index
    %46 = vector.load %arg5[%c3, %c0_37, %c0_38] : memref<4x32x32xf32, #tpu.memory_space<vmem>>, vector<1x32x32xf32>
    %47 = vector.shape_cast %46 : vector<1x32x32xf32> to vector<32x32xf32>
    %cst_39 = arith.constant dense<0.000000e+00> : vector<8x32xf32>
    %48 = tpu.matmul %45, %47, %cst_39 {dimension_numbers = #tpu.dot_dimension_numbers<[1], [0], [0], [1], [0, 0, 1, 1], [], []>} : vector<8x32xf32>, vector<32x32xf32>, vector<8x32xf32> -> vector<8x32xf32>
    %c3_40 = arith.constant 3 : index
    %c0_41 = arith.constant 0 : index
    %c0_42 = arith.constant 0 : index
    %49 = vector.load %arg6[%c3_40, %c0_41, %c0_42] : memref<4x1x32xf32, #tpu.memory_space<vmem>>, vector<1x1x32xf32>
    %50 = vector.shape_cast %49 : vector<1x1x32xf32> to vector<1x32xf32>
    %51 = vector.broadcast %50 : vector<1x32xf32> to vector<8x32xf32>
    %52 = arith.addf %48, %51 : vector<8x32xf32>
    %53 = arith.addf %34, %52 : vector<8x32xf32>
    %cst_43 = arith.constant 0.000000e+00 : f32
    %54 = vector.broadcast %cst_43 : f32 to vector<8x32xf32>
    %55 = arith.maximumf %53, %54 : vector<8x32xf32>
    %c0_44 = arith.constant 0 : index
    %c0_45 = arith.constant 0 : index
    %c0_46 = arith.constant 0 : index
    %56 = vector.load %arg7[%c0_44, %c0_45, %c0_46] : memref<2x32x8xf32, #tpu.memory_space<vmem>>, vector<1x32x8xf32>
    %57 = vector.shape_cast %56 : vector<1x32x8xf32> to vector<32x8xf32>
    %cst_47 = arith.constant dense<0.000000e+00> : vector<8x8xf32>
    %58 = tpu.matmul %55, %57, %cst_47 {dimension_numbers = #tpu.dot_dimension_numbers<[1], [0], [0], [1], [0, 0, 1, 1], [], []>} : vector<8x32xf32>, vector<32x8xf32>, vector<8x8xf32> -> vector<8x8xf32>
    %c0_48 = arith.constant 0 : index
    %c0_49 = arith.constant 0 : index
    %c0_50 = arith.constant 0 : index
    %59 = vector.load %arg8[%c0_48, %c0_49, %c0_50] : memref<2x1x8xf32, #tpu.memory_space<vmem>>, vector<1x1x8xf32>
    %60 = vector.shape_cast %59 : vector<1x1x8xf32> to vector<1x8xf32>
    %61 = vector.broadcast %60 : vector<1x8xf32> to vector<8x8xf32>
    %62 = arith.addf %58, %61 : vector<8x8xf32>
    %c1_51 = arith.constant 1 : index
    %c0_52 = arith.constant 0 : index
    %c0_53 = arith.constant 0 : index
    %63 = vector.load %arg7[%c1_51, %c0_52, %c0_53] : memref<2x32x8xf32, #tpu.memory_space<vmem>>, vector<1x32x8xf32>
    %64 = vector.shape_cast %63 : vector<1x32x8xf32> to vector<32x8xf32>
    %cst_54 = arith.constant dense<0.000000e+00> : vector<8x8xf32>
    %65 = tpu.matmul %55, %64, %cst_54 {dimension_numbers = #tpu.dot_dimension_numbers<[1], [0], [0], [1], [0, 0, 1, 1], [], []>} : vector<8x32xf32>, vector<32x8xf32>, vector<8x8xf32> -> vector<8x8xf32>
    %c1_55 = arith.constant 1 : index
    %c0_56 = arith.constant 0 : index
    %c0_57 = arith.constant 0 : index
    %66 = vector.load %arg8[%c1_55, %c0_56, %c0_57] : memref<2x1x8xf32, #tpu.memory_space<vmem>>, vector<1x1x8xf32>
    %67 = vector.shape_cast %66 : vector<1x1x8xf32> to vector<1x8xf32>
    %68 = vector.broadcast %67 : vector<1x8xf32> to vector<8x8xf32>
    %69 = arith.addf %65, %68 : vector<8x8xf32>
    %70 = arith.mulf %62, %62 : vector<8x8xf32>
    %71 = arith.mulf %69, %69 : vector<8x8xf32>
    %72 = arith.addf %70, %71 : vector<8x8xf32>
    %cst_58 = arith.constant 9.99999993E-9 : f32
    %73 = vector.broadcast %cst_58 : f32 to vector<8x8xf32>
    %74 = arith.maximumf %72, %73 : vector<8x8xf32>
    %75 = math.rsqrt %74 : vector<8x8xf32>
    %76 = arith.mulf %62, %75 : vector<8x8xf32>
    %c0_59 = arith.constant 0 : index
    %c0_60 = arith.constant 0 : index
    %77 = vector.load %arg9[%c0_59, %c0_60] : memref<8x8xf32, #tpu.memory_space<vmem>>, vector<8x8xf32>
    tpu.vector_store %arg9[%c0_59, %c0_60], %76 {strides = array<i32>} : memref<8x8xf32, #tpu.memory_space<vmem>>, vector<8x8xf32>,
    %78 = arith.mulf %69, %75 : vector<8x8xf32>
    %c0_61 = arith.constant 0 : index
    %c0_62 = arith.constant 0 : index
    %79 = vector.load %arg10[%c0_61, %c0_62] : memref<8x8xf32, #tpu.memory_space<vmem>>, vector<8x8xf32>
    tpu.vector_store %arg10[%c0_61, %c0_62], %78 {strides = array<i32>} : memref<8x8xf32, #tpu.memory_space<vmem>>, vector<8x8xf32>,
    return
  }
  func.func @transform_0(%arg0: i32) -> (i32, i32) {
    %c0_i32 = arith.constant 0 : i32
    %c0_i32_0 = arith.constant 0 : i32
    return %arg0, %c0_i32 : i32, i32
  }
  func.func @transform_1(%arg0: i32) -> (i32, i32) {
    %c0_i32 = arith.constant 0 : i32
    %c0_i32_0 = arith.constant 0 : i32
    return %arg0, %c0_i32 : i32, i32
  }
  func.func @transform_2(%arg0: i32) -> (i32, i32, i32) {
    %c0_i32 = arith.constant 0 : i32
    %c0_i32_0 = arith.constant 0 : i32
    %c0_i32_1 = arith.constant 0 : i32
    %c0_i32_2 = arith.constant 0 : i32
    return %c0_i32, %c0_i32_0, %c0_i32_1 : i32, i32, i32
  }
  func.func @transform_3(%arg0: i32) -> (i32, i32) {
    %c0_i32 = arith.constant 0 : i32
    %c0_i32_0 = arith.constant 0 : i32
    %c0_i32_1 = arith.constant 0 : i32
    return %c0_i32, %c0_i32_0 : i32, i32
  }
  func.func @transform_4(%arg0: i32) -> (i32, i32, i32) {
    %c0_i32 = arith.constant 0 : i32
    %c0_i32_0 = arith.constant 0 : i32
    %c0_i32_1 = arith.constant 0 : i32
    %c0_i32_2 = arith.constant 0 : i32
    return %c0_i32, %c0_i32_0, %c0_i32_1 : i32, i32, i32
  }
  func.func @transform_5(%arg0: i32) -> (i32, i32, i32) {
    %c0_i32 = arith.constant 0 : i32
    %c0_i32_0 = arith.constant 0 : i32
    %c0_i32_1 = arith.constant 0 : i32
    %c0_i32_2 = arith.constant 0 : i32
    return %c0_i32, %c0_i32_0, %c0_i32_1 : i32, i32, i32
  }
  func.func @transform_6(%arg0: i32) -> (i32, i32, i32) {
    %c0_i32 = arith.constant 0 : i32
    %c0_i32_0 = arith.constant 0 : i32
    %c0_i32_1 = arith.constant 0 : i32
    %c0_i32_2 = arith.constant 0 : i32
    return %c0_i32, %c0_i32_0, %c0_i32_1 : i32, i32, i32
  }
  func.func @transform_7(%arg0: i32) -> (i32, i32, i32) {
    %c0_i32 = arith.constant 0 : i32
    %c0_i32_0 = arith.constant 0 : i32
    %c0_i32_1 = arith.constant 0 : i32
    %c0_i32_2 = arith.constant 0 : i32
    return %c0_i32, %c0_i32_0, %c0_i32_1 : i32, i32, i32
  }
  func.func @transform_8(%arg0: i32) -> (i32, i32) {
    %c0_i32 = arith.constant 0 : i32
    %c0_i32_0 = arith.constant 0 : i32
    return %arg0, %c0_i32 : i32, i32
  }
  func.func @transform_9(%arg0: i32) -> (i32, i32) {
    %c0_i32 = arith.constant 0 : i32
    %c0_i32_0 = arith.constant 0 : i32
    return %arg0, %c0_i32 : i32, i32
  }
}

</mosaic_0001>

<llo_original>
// kernel: tpu_custom_call.1
$region0: #{tpu_custom_call.1}
  #allocation0 [shape = 'u32[]', space=smem, size = 0x4, offset = 0x4, fixed_abs, tag = 'smem constant byte address 0x4 - core index']
  #allocation1 [shape = 'u32[144,128]{1,0:T(1,128)}', space=vmem, size = 0x12000, scoped, tag = 'internal scratch']
  %s0 = inlined_call_operand.vmem [shape: f32[8,32], index: 0, kind: input, shape index: {}]
  %s1 = inlined_call_operand.vmem [shape: f32[8,32], index: 1, kind: input, shape index: {}]
  %s2 = inlined_call_operand.vmem [shape: f32[2,32,32], index: 2, kind: input, shape index: {}]
  %s3 = inlined_call_operand.hbm [shape: f32[1,32], index: 3, kind: input, shape index: {}]
  %s4 = inlined_call_operand.hbm [shape: f32[4,32,32], index: 4, kind: input, shape index: {}]
  %s5 = inlined_call_operand.vmem [shape: f32[4,1,32], index: 5, kind: input, shape index: {}]
  %s6 = inlined_call_operand.vmem [shape: f32[2,32,8], index: 6, kind: input, shape index: {}]
  %s7 = inlined_call_operand.vmem [shape: f32[2,1,8], index: 7, kind: input, shape index: {}]
  %s8 = inlined_call_operand.hbm [shape: f32[8,8], index: 8, kind: output, shape index: {0}]
  %s9 = inlined_call_operand.hbm [shape: f32[8,8], index: 9, kind: output, shape index: {1}]
  %10 = xla_tuple %s8, %s9
  %s11 = sld [smem:[#allocation0]]
  $region58: #{tpu_custom_call.1} parent=0
    _
  %s13 = ssub.s32 1, %s11
  %s14 = scalar_select 0, %s13, %s11
  $region1: #{tpu_custom_call.1} parent=0
    #allocation2 [shape = 'u8[512]{0}', space=vmem, size = 0x400, scoped, tag = 'input window, operand 3, single buffered']
    #allocation3 [shape = 's32[1]{0}', space=sflag, size = 0x4, scoped, tag = 'scoped memory for tpu_custom_call.1']
    #allocation4 [shape = 's32[1]{0}', space=sflag, size = 0x4, scoped, tag = 'scoped memory for tpu_custom_call.1']
    #allocation5 [shape = 'u8[65536]{0}', space=vmem, size = 0x10000, scoped, tag = 'input window, operand 4, single buffered']
    #allocation6 [shape = 's32[1]{0}', space=sflag, size = 0x4, scoped, tag = 'scoped memory for tpu_custom_call.1']
    #allocation7 [shape = 'u8[4096]{0}', space=vmem, size = 0x1000, scoped, tag = 'output window, operand 0, single buffered']
    #allocation8 [shape = 'u8[4096]{0}', space=vmem, size = 0x1000, scoped, tag = 'output window, operand 1, single buffered']
    #allocation9 [shape = 's32[1]{0}', space=sflag, size = 0x4, scoped, tag = 'scoped memory for tpu_custom_call.1']
    %15 = vsyncpa [#allocation3], 0
    %16 = vsyncpa [#allocation6], 0
    %17 = vsyncpa [#allocation4], 0
    %18 = vsyncpa [#allocation9], 0
    // Predicated region
    $region2: #{tpu_custom_call.1} parent=1 // pred_check
      _
    $region3: #{tpu_custom_call.1} parent=1 // pred_check_branch
      %20 = sbr.rel (0) target = $region5
    $region4: #{tpu_custom_call.1} parent=1 // pred_region
      _
    $region5: #{tpu_custom_call.1} parent=1 // pred_fallthru
      _
    // Predicated region
    $region6: #{tpu_custom_call.1} parent=1 // pred_check
      _
    $region7: #{tpu_custom_call.1} parent=1 // pred_check_branch
      %22 = sbr.rel (0) target = $region9
    $region8: #{tpu_custom_call.1} parent=1 // pred_region
      _
    $region9: #{tpu_custom_call.1} parent=1 // pred_fallthru
      _
    // Predicated region
    $region10: #{tpu_custom_call.1} parent=1 // pred_check
      _
    $region11: #{tpu_custom_call.1} parent=1 // pred_check_branch
      %24 = sbr.rel (0) target = $region13
    $region12: #{tpu_custom_call.1} parent=1 // pred_region
      _
    $region13: #{tpu_custom_call.1} parent=1 // pred_fallthru
      _
    // Predicated region
    $region14: #{tpu_custom_call.1} parent=1 // pred_check
      _
    $region15: #{tpu_custom_call.1} parent=1 // pred_check_branch
      %26 = sbr.rel (0) target = $region17
    $region16: #{tpu_custom_call.1} parent=1 // pred_region
      %s28 = ssub.s32 16, 16
      %29 = vsyncadd [#allocation3], %s28
      %s31 = sshll.u32 [#allocation2], 4
      %s32 = int_to_ptr.vmem [resolvable:$true] %s31
      %34 = dma.hbm_to_vmem [thread:$0]  %s3, 16, %s32, [#allocation3]
    $region17: #{tpu_custom_call.1} parent=1 // pred_fallthru
      _
    // Predicated region
    $region18: #{tpu_custom_call.1} parent=1 // pred_check
      _
    $region19: #{tpu_custom_call.1} parent=1 // pred_check_branch
      %36 = sbr.rel (0) target = $region21
    $region20: #{tpu_custom_call.1} parent=1 // pred_region
      %s38 = ssub.s32 2048, 2048
      %39 = vsyncadd [#allocation6], %s38
      %s40 = sshll.u32 [#allocation5], 4
      %s41 = int_to_ptr.vmem [resolvable:$true] %s40
      %46 = dma.hbm_to_vmem [thread:$0]  %s4, 2048, %s41, [#allocation6], 128, 128, 8
    $region21: #{tpu_custom_call.1} parent=1 // pred_fallthru
      _
    // Predicated region
    $region22: #{tpu_custom_call.1} parent=1 // pred_check
      _
    $region23: #{tpu_custom_call.1} parent=1 // pred_check_branch
      %48 = sbr.rel (0) target = $region25
    $region24: #{tpu_custom_call.1} parent=1 // pred_region
      _
    $region25: #{tpu_custom_call.1} parent=1 // pred_fallthru
      _
    // Predicated region
    $region26: #{tpu_custom_call.1} parent=1 // pred_check
      _
    $region27: #{tpu_custom_call.1} parent=1 // pred_check_branch
      %50 = sbr.rel (0) target = $region29
    $region28: #{tpu_custom_call.1} parent=1 // pred_region
      _
    $region29: #{tpu_custom_call.1} parent=1 // pred_fallthru
      _
    // Predicated region
    $region30: #{tpu_custom_call.1} parent=1 // pred_check
      _
    $region31: #{tpu_custom_call.1} parent=1 // pred_check_branch
      %52 = sbr.rel (0) target = $region33
    $region32: #{tpu_custom_call.1} parent=1 // pred_region
      _
    $region33: #{tpu_custom_call.1} parent=1 // pred_fallthru
      _
    // Predicated region
    $region34: #{tpu_custom_call.1} parent=1 // pred_check
      _
    $region35: #{tpu_custom_call.1} parent=1 // pred_check_branch
      %54 = sbr.rel (0) target = $region37
    $region36: #{tpu_custom_call.1} parent=1 // pred_region
      %55 = dma.done [#allocation3], 16
    $region37: #{tpu_custom_call.1} parent=1 // pred_fallthru
      _
    // Predicated region
    $region38: #{tpu_custom_call.1} parent=1 // pred_check
      _
    $region39: #{tpu_custom_call.1} parent=1 // pred_check_branch
      %57 = sbr.rel (0) target = $region41
    $region40: #{tpu_custom_call.1} parent=1 // pred_region
      %58 = dma.done [#allocation6], 2048
    $region41: #{tpu_custom_call.1} parent=1 // pred_fallthru
      _
    %v59 = vld [vmem:[%s0] sm:$0xff]
    %v60 = vmax.f32 %v59, 0.0
    %v61 = vld [vmem:[%s2] sm:$0xff]
    %v62 = vld [vmem:[%s2 + $0x8] sm:$0xff]
    %v63 = vld [vmem:[%s2 + $0x10] sm:$0xff]
    %v64 = vld [vmem:[%s2 + $0x18] sm:$0xff]
    %v65 = vld [vmem:[%s1] sm:$0xff]
    %v66 = vmax.f32 %v65, 0.0
    %s67 = scalar_lea.vmem %s2, 32
    %v68 = vld [vmem:[%s67] sm:$0xff]
    %v69 = vld [vmem:[%s67 + $0x8] sm:$0xff]
    %v70 = vld [vmem:[%s67 + $0x10] sm:$0xff]
    %v71 = vld [vmem:[%s67 + $0x18] sm:$0xff]
    %vm72 = vcmask 261120
    %v74 = vsel %vm72, %v66, 0
    %76 = vmatprep.subr.mxu0 0.0
    %77 = vmatpush1.msra.mxu0 %v68
    %78 = vmatprep.subr.mxu0 0.0
    %79 = vmatpush1.msra.mxu0 %v69
    %80 = vmatprep.subr.mxu0 0.0
    %81 = vmatpush1.msra.mxu0 %v70
    %82 = vmatprep.subr.mxu0 0.0
    %83 = vmatpush1.msra.mxu0 %v71
    %84 = vmatprep.subr.mxu0 0.0
    %85 = vmatpush1.msra.mxu0 0.0
    %86 = vmatprep.subr.mxu0 0.0
    %87 = vmatpush1.msra.mxu0 0.0
    %88 = vmatprep.subr.mxu0 0.0
    %89 = vmatpush1.msra.mxu0 0.0
    %90 = vmatprep.subr.mxu0 0.0
    %91 = vmatpush1.msra.mxu0 0.0
    %92 = vmatprep.subr.mxu0 0.0
    %93 = vmatpush1.msra.mxu0 0.0
    %94 = vmatprep.subr.mxu0 0.0
    %95 = vmatpush1.msra.mxu0 0.0
    %96 = vmatprep.subr.mxu0 0.0
    %97 = vmatpush1.msra.mxu0 0.0
    %98 = vmatprep.subr.mxu0 0.0
    %99 = vmatpush1.msra.mxu0 0.0
    %100 = vmatprep.subr.mxu0 0.0
    %101 = vmatpush1.msra.mxu0 0.0
    %102 = vmatprep.subr.mxu0 0.0
    %103 = vmatpush1.msra.mxu0 0.0
    %104 = vmatprep.subr.mxu0 0.0
    %105 = vmatpush1.msra.mxu0 0.0
    %106 = vmatprep.subr.mxu0 0.0
    %107 = vmatpush1.msra.mxu0 0.0
    %108 = vmatprep.subr.mxu0 0.0
    %109 = vmatpush1.msra.mxu0 0.0
    %110 = vmatprep.subr.mxu0 0.0
    %111 = vmatpush1.msra.mxu0 0.0
    %112 = vmatprep.subr.mxu0 0.0
    %113 = vmatpush1.msra.mxu0 0.0
    %114 = vmatprep.subr.mxu0 0.0
    %115 = vmatpush1.msra.mxu0 0.0
    %116 = vmatprep.subr.mxu0 0.0
    %117 = vmatpush1.msra.mxu0 0.0
    %118 = vmatprep.subr.mxu0 0.0
    %119 = vmatpush1.msra.mxu0 0.0
    %120 = vmatprep.subr.mxu0 0.0
    %121 = vmatpush1.msra.mxu0 0.0
    %122 = vmatprep.subr.mxu0 0.0
    %123 = vmatpush1.msra.mxu0 0.0
    %124 = vmatprep.subr.mxu0 0.0
    %125 = vmatpush1.msra.mxu0 0.0
    %126 = vmatprep.subr.mxu0 0.0
    %127 = vmatpush1.msra.mxu0 0.0
    %128 = vmatprep.subr.mxu0 0.0
    %129 = vmatpush1.msra.mxu0 0.0
    %130 = vmatprep.subr.mxu0 0.0
    %131 = vmatpush1.msra.mxu0 0.0
    %132 = vmatprep.subr.mxu0 0.0
    %133 = vmatpush1.msra.mxu0 0.0
    %134 = vmatprep.subr.mxu0 0.0
    %135 = vmatpush1.msra.mxu0 0.0
    %136 = vmatprep.subr.mxu0 0.0
    %137 = vmatpush1.msra.mxu0 0.0
    %138 = vmatprep.subr.mxu0 0.0
    %139 = vmatpush1.msra.mxu0 0.0
    %140 = vmatprep.mubr.f32.mxu0 0.0
    %141 = vmatmul.mubr.f32.gmra.mrb[0].mxu0 %v74
    %v142 = vpop.f32.mrb[0].mxu0
    %v143 = vadd.f32 0.0, %v142
    %v144 = vpop.f32.mrb[0].mxu0
    %145 = vdwg.mxu0
    %v147 = vsel %vm72, %v60, 0
    %149 = vmatprep.subr.mxu0 0.0
    %150 = vmatpush1.msra.mxu0 %v61
    %151 = vmatprep.subr.mxu0 0.0
    %152 = vmatpush1.msra.mxu0 %v62
    %153 = vmatprep.subr.mxu0 0.0
    %154 = vmatpush1.msra.mxu0 %v63
    %155 = vmatprep.subr.mxu0 0.0
    %156 = vmatpush1.msra.mxu0 %v64
    %157 = vmatprep.subr.mxu0 0.0
    %158 = vmatpush1.msra.mxu0 0.0
    %159 = vmatprep.subr.mxu0 0.0
    %160 = vmatpush1.msra.mxu0 0.0
    %161 = vmatprep.subr.mxu0 0.0
    %162 = vmatpush1.msra.mxu0 0.0
    %163 = vmatprep.subr.mxu0 0.0
    %164 = vmatpush1.msra.mxu0 0.0
    %165 = vmatprep.subr.mxu0 0.0
    %166 = vmatpush1.msra.mxu0 0.0
    %167 = vmatprep.subr.mxu0 0.0
    %168 = vmatpush1.msra.mxu0 0.0
    %169 = vmatprep.subr.mxu0 0.0
    %170 = vmatpush1.msra.mxu0 0.0
    %171 = vmatprep.subr.mxu0 0.0
    %172 = vmatpush1.msra.mxu0 0.0
    %173 = vmatprep.subr.mxu0 0.0
    %174 = vmatpush1.msra.mxu0 0.0
    %175 = vmatprep.subr.mxu0 0.0
    %176 = vmatpush1.msra.mxu0 0.0
    %177 = vmatprep.subr.mxu0 0.0
    %178 = vmatpush1.msra.mxu0 0.0
    %179 = vmatprep.subr.mxu0 0.0
    %180 = vmatpush1.msra.mxu0 0.0
    %181 = vmatprep.subr.mxu0 0.0
    %182 = vmatpush1.msra.mxu0 0.0
    %183 = vmatprep.subr.mxu0 0.0
    %184 = vmatpush1.msra.mxu0 0.0
    %185 = vmatprep.subr.mxu0 0.0
    %186 = vmatpush1.msra.mxu0 0.0
    %187 = vmatprep.subr.mxu0 0.0
    %188 = vmatpush1.msra.mxu0 0.0
    %189 = vmatprep.subr.mxu0 0.0
    %190 = vmatpush1.msra.mxu0 0.0
    %191 = vmatprep.subr.mxu0 0.0
    %192 = vmatpush1.msra.mxu0 0.0
    %193 = vmatprep.subr.mxu0 0.0
    %194 = vmatpush1.msra.mxu0 0.0
    %195 = vmatprep.subr.mxu0 0.0
    %196 = vmatpush1.msra.mxu0 0.0
    %197 = vmatprep.subr.mxu0 0.0
    %198 = vmatpush1.msra.mxu0 0.0
    %199 = vmatprep.subr.mxu0 0.0
    %200 = vmatpush1.msra.mxu0 0.0
    %201 = vmatprep.subr.mxu0 0.0
    %202 = vmatpush1.msra.mxu0 0.0
    %203 = vmatprep.subr.mxu0 0.0
    %204 = vmatpush1.msra.mxu0 0.0
    %205 = vmatprep.subr.mxu0 0.0
    %206 = vmatpush1.msra.mxu0 0.0
    %207 = vmatprep.subr.mxu0 0.0
    %208 = vmatpush1.msra.mxu0 0.0
    %209 = vmatprep.subr.mxu0 0.0
    %210 = vmatpush1.msra.mxu0 0.0
    %211 = vmatprep.subr.mxu0 0.0
    %212 = vmatpush1.msra.mxu0 0.0
    %213 = vmatprep.mubr.f32.mxu0 0.0
    %214 = vmatmul.mubr.f32.gmra.mrb[0].mxu0 %v147
    %v215 = vpop.f32.mrb[0].mxu0
    %v216 = vadd.f32 %v143, %v215
    %v217 = vpop.f32.mrb[0].mxu0
    %218 = vdwg.mxu0
    %v219 = vld [vmem:[#allocation2] sm:$0x1]
    %v221 = vlaneseq
    %v222 = vshrl.u32 %v221, 7
    %v223 = vsub.s32 0, %v222
    %v224 = vrot.slane %v219, %v223
    %v226 = vadd.f32 %v216, %v224
    %v227 = vmax.f32 %v226, 0.0
    %v228 = vld [vmem:[#allocation5] sm:$0xff]
    %v229 = vld [vmem:[#allocation5 + $0x8] sm:$0xff]
    %v230 = vld [vmem:[#allocation5 + $0x10] sm:$0xff]
    %v231 = vld [vmem:[#allocation5 + $0x18] sm:$0xff]
    %v232 = vld [vmem:[%s5] sm:$0x1]
    %v234 = vlaneseq
    %v235 = vshrl.u32 %v234, 7
    %v236 = vsub.s32 0, %v235
    %v237 = vrot.slane %v232, %v236
    %v240 = vsel %vm72, %v227, 0
    %242 = vmatprep.subr.mxu0 0.0
    %243 = vmatpush1.msra.mxu0 %v228
    %244 = vmatprep.subr.mxu0 0.0
    %245 = vmatpush1.msra.mxu0 %v229
    %246 = vmatprep.subr.mxu0 0.0
    %247 = vmatpush1.msra.mxu0 %v230
    %248 = vmatprep.subr.mxu0 0.0
    %249 = vmatpush1.msra.mxu0 %v231
    %250 = vmatprep.subr.mxu0 0.0
    %251 = vmatpush1.msra.mxu0 0.0
    %252 = vmatprep.subr.mxu0 0.0
    %253 = vmatpush1.msra.mxu0 0.0
    %254 = vmatprep.subr.mxu0 0.0
    %255 = vmatpush1.msra.mxu0 0.0
    %256 = vmatprep.subr.mxu0 0.0
    %257 = vmatpush1.msra.mxu0 0.0
    %258 = vmatprep.subr.mxu0 0.0
    %259 = vmatpush1.msra.mxu0 0.0
    %260 = vmatprep.subr.mxu0 0.0
    %261 = vmatpush1.msra.mxu0 0.0
    %262 = vmatprep.subr.mxu0 0.0
    %263 = vmatpush1.msra.mxu0 0.0
    %264 = vmatprep.subr.mxu0 0.0
    %265 = vmatpush1.msra.mxu0 0.0
    %266 = vmatprep.subr.mxu0 0.0
    %267 = vmatpush1.msra.mxu0 0.0
    %268 = vmatprep.subr.mxu0 0.0
    %269 = vmatpush1.msra.mxu0 0.0
    %270 = vmatprep.subr.mxu0 0.0
    %271 = vmatpush1.msra.mxu0 0.0
    %272 = vmatprep.subr.mxu0 0.0
    %273 = vmatpush1.msra.mxu0 0.0
    %274 = vmatprep.subr.mxu0 0.0
    %275 = vmatpush1.msra.mxu0 0.0
    %276 = vmatprep.subr.mxu0 0.0
    %277 = vmatpush1.msra.mxu0 0.0
    %278 = vmatprep.subr.mxu0 0.0
    %279 = vmatpush1.msra.mxu0 0.0
    %280 = vmatprep.subr.mxu0 0.0
    %281 = vmatpush1.msra.mxu0 0.0
    %282 = vmatprep.subr.mxu0 0.0
    %283 = vmatpush1.msra.mxu0 0.0
    %284 = vmatprep.subr.mxu0 0.0
    %285 = vmatpush1.msra.mxu0 0.0
    %286 = vmatprep.subr.mxu0 0.0
    %287 = vmatpush1.msra.mxu0 0.0
    %288 = vmatprep.subr.mxu0 0.0
    %289 = vmatpush1.msra.mxu0 0.0
    %290 = vmatprep.subr.mxu0 0.0
    %291 = vmatpush1.msra.mxu0 0.0
    %292 = vmatprep.subr.mxu0 0.0
    %293 = vmatpush1.msra.mxu0 0.0
    %294 = vmatprep.subr.mxu0 0.0
    %295 = vmatpush1.msra.mxu0 0.0
    %296 = vmatprep.subr.mxu0 0.0
    %297 = vmatpush1.msra.mxu0 0.0
    %298 = vmatprep.subr.mxu0 0.0
    %299 = vmatpush1.msra.mxu0 0.0
    %300 = vmatprep.subr.mxu0 0.0
    %301 = vmatpush1.msra.mxu0 0.0
    %302 = vmatprep.subr.mxu0 0.0
    %303 = vmatpush1.msra.mxu0 0.0
    %304 = vmatprep.subr.mxu0 0.0
    %305 = vmatpush1.msra.mxu0 0.0
    %306 = vmatprep.mubr.f32.mxu0 0.0
    %307 = vmatmul.mubr.f32.gmra.mrb[0].mxu0 %v240
    %v308 = vpop.f32.mrb[0].mxu0
    %v309 = vadd.f32 %v237, %v308
    %v310 = vpop.f32.mrb[0].mxu0
    %311 = vdwg.mxu0
    %v312 = vmax.f32 %v309, 0.0
    %s313 = scalar_lea.vmem [#allocation5], 32
    %v314 = vld [vmem:[%s313] sm:$0xff]
    %v315 = vld [vmem:[%s313 + $0x8] sm:$0xff]
    %v316 = vld [vmem:[%s313 + $0x10] sm:$0xff]
    %v317 = vld [vmem:[%s313 + $0x18] sm:$0xff]
    %s318 = scalar_lea.vmem %s5, 1
    %v319 = vld [vmem:[%s318] sm:$0x1]
    %v321 = vlaneseq
    %v322 = vshrl.u32 %v321, 7
    %v323 = vsub.s32 0, %v322
    %v324 = vrot.slane %v319, %v323
    %v327 = vsel %vm72, %v312, 0
    %329 = vmatprep.subr.mxu0 0.0
    %330 = vmatpush1.msra.mxu0 %v314
    %331 = vmatprep.subr.mxu0 0.0
    %332 = vmatpush1.msra.mxu0 %v315
    %333 = vmatprep.subr.mxu0 0.0
    %334 = vmatpush1.msra.mxu0 %v316
    %335 = vmatprep.subr.mxu0 0.0
    %336 = vmatpush1.msra.mxu0 %v317
    %337 = vmatprep.subr.mxu0 0.0
    %338 = vmatpush1.msra.mxu0 0.0
    %339 = vmatprep.subr.mxu0 0.0
    %340 = vmatpush1.msra.mxu0 0.0
    %341 = vmatprep.subr.mxu0 0.0
    %342 = vmatpush1.msra.mxu0 0.0
    %343 = vmatprep.subr.mxu0 0.0
    %344 = vmatpush1.msra.mxu0 0.0
    %345 = vmatprep.subr.mxu0 0.0
    %346 = vmatpush1.msra.mxu0 0.0
    %347 = vmatprep.subr.mxu0 0.0
    %348 = vmatpush1.msra.mxu0 0.0
    %349 = vmatprep.subr.mxu0 0.0
    %350 = vmatpush1.msra.mxu0 0.0
    %351 = vmatprep.subr.mxu0 0.0
    %352 = vmatpush1.msra.mxu0 0.0
    %353 = vmatprep.subr.mxu0 0.0
    %354 = vmatpush1.msra.mxu0 0.0
    %355 = vmatprep.subr.mxu0 0.0
    %356 = vmatpush1.msra.mxu0 0.0
    %357 = vmatprep.subr.mxu0 0.0
    %358 = vmatpush1.msra.mxu0 0.0
    %359 = vmatprep.subr.mxu0 0.0
    %360 = vmatpush1.msra.mxu0 0.0
    %361 = vmatprep.subr.mxu0 0.0
    %362 = vmatpush1.msra.mxu0 0.0
    %363 = vmatprep.subr.mxu0 0.0
    %364 = vmatpush1.msra.mxu0 0.0
    %365 = vmatprep.subr.mxu0 0.0
    %366 = vmatpush1.msra.mxu0 0.0
    %367 = vmatprep.subr.mxu0 0.0
    %368 = vmatpush1.msra.mxu0 0.0
    %369 = vmatprep.subr.mxu0 0.0
    %370 = vmatpush1.msra.mxu0 0.0
    %371 = vmatprep.subr.mxu0 0.0
    %372 = vmatpush1.msra.mxu0 0.0
    %373 = vmatprep.subr.mxu0 0.0
    %374 = vmatpush1.msra.mxu0 0.0
    %375 = vmatprep.subr.mxu0 0.0
    %376 = vmatpush1.msra.mxu0 0.0
    %377 = vmatprep.subr.mxu0 0.0
    %378 = vmatpush1.msra.mxu0 0.0
    %379 = vmatprep.subr.mxu0 0.0
    %380 = vmatpush1.msra.mxu0 0.0
    %381 = vmatprep.subr.mxu0 0.0
    %382 = vmatpush1.msra.mxu0 0.0
    %383 = vmatprep.subr.mxu0 0.0
    %384 = vmatpush1.msra.mxu0 0.0
    %385 = vmatprep.subr.mxu0 0.0
    %386 = vmatpush1.msra.mxu0 0.0
    %387 = vmatprep.subr.mxu0 0.0
    %388 = vmatpush1.msra.mxu0 0.0
    %389 = vmatprep.subr.mxu0 0.0
    %390 = vmatpush1.msra.mxu0 0.0
    %391 = vmatprep.subr.mxu0 0.0
    %392 = vmatpush1.msra.mxu0 0.0
    %393 = vmatprep.mubr.f32.mxu0 0.0
    %394 = vmatmul.mubr.f32.gmra.mrb[0].mxu0 %v327
    %v395 = vpop.f32.mrb[0].mxu0
    %v396 = vadd.f32 %v324, %v395
    %v397 = vpop.f32.mrb[0].mxu0
    %398 = vdwg.mxu0
    %v399 = vadd.f32 %v226, %v396
    %v400 = vmax.f32 %v399, 0.0
    %s401 = scalar_lea.vmem [#allocation5], 64
    %v402 = vld [vmem:[%s401] sm:$0xff]
    %v403 = vld [vmem:[%s401 + $0x8] sm:$0xff]
    %v404 = vld [vmem:[%s401 + $0x10] sm:$0xff]
    %v405 = vld [vmem:[%s401 + $0x18] sm:$0xff]
    %s406 = scalar_lea.vmem %s5, 2
    %v407 = vld [vmem:[%s406] sm:$0x1]
    %v409 = vlaneseq
    %v410 = vshrl.u32 %v409, 7
    %v411 = vsub.s32 0, %v410
    %v412 = vrot.slane %v407, %v411
    %v415 = vsel %vm72, %v400, 0
    %417 = vmatprep.subr.mxu0 0.0
    %418 = vmatpush1.msra.mxu0 %v402
    %419 = vmatprep.subr.mxu0 0.0
    %420 = vmatpush1.msra.mxu0 %v403
    %421 = vmatprep.subr.mxu0 0.0
    %422 = vmatpush1.msra.mxu0 %v404
    %423 = vmatprep.subr.mxu0 0.0
    %424 = vmatpush1.msra.mxu0 %v405
    %425 = vmatprep.subr.mxu0 0.0
    %426 = vmatpush1.msra.mxu0 0.0
    %427 = vmatprep.subr.mxu0 0.0
    %428 = vmatpush1.msra.mxu0 0.0
    %429 = vmatprep.subr.mxu0 0.0
    %430 = vmatpush1.msra.mxu0 0.0
    %431 = vmatprep.subr.mxu0 0.0
    %432 = vmatpush1.msra.mxu0 0.0
    %433 = vmatprep.subr.mxu0 0.0
    %434 = vmatpush1.msra.mxu0 0.0
    %435 = vmatprep.subr.mxu0 0.0
    %436 = vmatpush1.msra.mxu0 0.0
    %437 = vmatprep.subr.mxu0 0.0
    %438 = vmatpush1.msra.mxu0 0.0
    %439 = vmatprep.subr.mxu0 0.0
    %440 = vmatpush1.msra.mxu0 0.0
    %441 = vmatprep.subr.mxu0 0.0
    %442 = vmatpush1.msra.mxu0 0.0
    %443 = vmatprep.subr.mxu0 0.0
    %444 = vmatpush1.msra.mxu0 0.0
    %445 = vmatprep.subr.mxu0 0.0
    %446 = vmatpush1.msra.mxu0 0.0
    %447 = vmatprep.subr.mxu0 0.0
    %448 = vmatpush1.msra.mxu0 0.0
    %449 = vmatprep.subr.mxu0 0.0
    %450 = vmatpush1.msra.mxu0 0.0
    %451 = vmatprep.subr.mxu0 0.0
    %452 = vmatpush1.msra.mxu0 0.0
    %453 = vmatprep.subr.mxu0 0.0
    %454 = vmatpush1.msra.mxu0 0.0
    %455 = vmatprep.subr.mxu0 0.0
    %456 = vmatpush1.msra.mxu0 0.0
    %457 = vmatprep.subr.mxu0 0.0
    %458 = vmatpush1.msra.mxu0 0.0
    %459 = vmatprep.subr.mxu0 0.0
    %460 = vmatpush1.msra.mxu0 0.0
    %461 = vmatprep.subr.mxu0 0.0
    %462 = vmatpush1.msra.mxu0 0.0
    %463 = vmatprep.subr.mxu0 0.0
    %464 = vmatpush1.msra.mxu0 0.0
    %465 = vmatprep.subr.mxu0 0.0
    %466 = vmatpush1.msra.mxu0 0.0
    %467 = vmatprep.subr.mxu0 0.0
    %468 = vmatpush1.msra.mxu0 0.0
    %469 = vmatprep.subr.mxu0 0.0
    %470 = vmatpush1.msra.mxu0 0.0
    %471 = vmatprep.subr.mxu0 0.0
    %472 = vmatpush1.msra.mxu0 0.0
    %473 = vmatprep.subr.mxu0 0.0
    %474 = vmatpush1.msra.mxu0 0.0
    %475 = vmatprep.subr.mxu0 0.0
    %476 = vmatpush1.msra.mxu0 0.0
    %477 = vmatprep.subr.mxu0 0.0
    %478 = vmatpush1.msra.mxu0 0.0
    %479 = vmatprep.subr.mxu0 0.0
    %480 = vmatpush1.msra.mxu0 0.0
    %481 = vmatprep.mubr.f32.mxu0 0.0
    %482 = vmatmul.mubr.f32.gmra.mrb[0].mxu0 %v415
    %v483 = vpop.f32.mrb[0].mxu0
    %v484 = vadd.f32 %v412, %v483
    %v485 = vpop.f32.mrb[0].mxu0
    %486 = vdwg.mxu0
    %v487 = vmax.f32 %v484, 0.0
    %s488 = scalar_lea.vmem [#allocation5], 96
    %v489 = vld [vmem:[%s488] sm:$0xff]
    %v490 = vld [vmem:[%s488 + $0x8] sm:$0xff]
    %v491 = vld [vmem:[%s488 + $0x10] sm:$0xff]
    %v492 = vld [vmem:[%s488 + $0x18] sm:$0xff]
    %s493 = scalar_lea.vmem %s5, 3
    %v494 = vld [vmem:[%s493] sm:$0x1]
    %v496 = vlaneseq
    %v497 = vshrl.u32 %v496, 7
    %v498 = vsub.s32 0, %v497
    %v499 = vrot.slane %v494, %v498
    %v502 = vsel %vm72, %v487, 0
    %504 = vmatprep.subr.mxu0 0.0
    %505 = vmatpush1.msra.mxu0 %v489
    %506 = vmatprep.subr.mxu0 0.0
    %507 = vmatpush1.msra.mxu0 %v490
    %508 = vmatprep.subr.mxu0 0.0
    %509 = vmatpush1.msra.mxu0 %v491
    %510 = vmatprep.subr.mxu0 0.0
    %511 = vmatpush1.msra.mxu0 %v492
    %512 = vmatprep.subr.mxu0 0.0
    %513 = vmatpush1.msra.mxu0 0.0
    %514 = vmatprep.subr.mxu0 0.0
    %515 = vmatpush1.msra.mxu0 0.0
    %516 = vmatprep.subr.mxu0 0.0
    %517 = vmatpush1.msra.mxu0 0.0
    %518 = vmatprep.subr.mxu0 0.0
    %519 = vmatpush1.msra.mxu0 0.0
    %520 = vmatprep.subr.mxu0 0.0
    %521 = vmatpush1.msra.mxu0 0.0
    %522 = vmatprep.subr.mxu0 0.0
    %523 = vmatpush1.msra.mxu0 0.0
    %524 = vmatprep.subr.mxu0 0.0
    %525 = vmatpush1.msra.mxu0 0.0
    %526 = vmatprep.subr.mxu0 0.0
    %527 = vmatpush1.msra.mxu0 0.0
    %528 = vmatprep.subr.mxu0 0.0
    %529 = vmatpush1.msra.mxu0 0.0
    %530 = vmatprep.subr.mxu0 0.0
    %531 = vmatpush1.msra.mxu0 0.0
    %532 = vmatprep.subr.mxu0 0.0
    %533 = vmatpush1.msra.mxu0 0.0
    %534 = vmatprep.subr.mxu0 0.0
    %535 = vmatpush1.msra.mxu0 0.0
    %536 = vmatprep.subr.mxu0 0.0
    %537 = vmatpush1.msra.mxu0 0.0
    %538 = vmatprep.subr.mxu0 0.0
    %539 = vmatpush1.msra.mxu0 0.0
    %540 = vmatprep.subr.mxu0 0.0
    %541 = vmatpush1.msra.mxu0 0.0
    %542 = vmatprep.subr.mxu0 0.0
    %543 = vmatpush1.msra.mxu0 0.0
    %544 = vmatprep.subr.mxu0 0.0
    %545 = vmatpush1.msra.mxu0 0.0
    %546 = vmatprep.subr.mxu0 0.0
    %547 = vmatpush1.msra.mxu0 0.0
    %548 = vmatprep.subr.mxu0 0.0
    %549 = vmatpush1.msra.mxu0 0.0
    %550 = vmatprep.subr.mxu0 0.0
    %551 = vmatpush1.msra.mxu0 0.0
    %552 = vmatprep.subr.mxu0 0.0
    %553 = vmatpush1.msra.mxu0 0.0
    %554 = vmatprep.subr.mxu0 0.0
    %555 = vmatpush1.msra.mxu0 0.0
    %556 = vmatprep.subr.mxu0 0.0
    %557 = vmatpush1.msra.mxu0 0.0
    %558 = vmatprep.subr.mxu0 0.0
    %559 = vmatpush1.msra.mxu0 0.0
    %560 = vmatprep.subr.mxu0 0.0
    %561 = vmatpush1.msra.mxu0 0.0
    %562 = vmatprep.subr.mxu0 0.0
    %563 = vmatpush1.msra.mxu0 0.0
    %564 = vmatprep.subr.mxu0 0.0
    %565 = vmatpush1.msra.mxu0 0.0
    %566 = vmatprep.subr.mxu0 0.0
    %567 = vmatpush1.msra.mxu0 0.0
    %568 = vmatprep.mubr.f32.mxu0 0.0
    %569 = vmatmul.mubr.f32.gmra.mrb[0].mxu0 %v502
    %v570 = vpop.f32.mrb[0].mxu0
    %v571 = vadd.f32 %v499, %v570
    %v572 = vpop.f32.mrb[0].mxu0
    %573 = vdwg.mxu0
    %v574 = vadd.f32 %v399, %v571
    %v575 = vmax.f32 %v574, 0.0
    %v576 = vld [vmem:[%s6] sm:$0xff]
    %v577 = vld [vmem:[%s6 + $0x8] sm:$0xff]
    %v578 = vld [vmem:[%s6 + $0x10] sm:$0xff]
    %v579 = vld [vmem:[%s6 + $0x18] sm:$0xff]
    %v580 = vld [vmem:[%s7] sm:$0x1]
    %v582 = vlaneseq
    %v583 = vshrl.u32 %v582, 7
    %v584 = vsub.s32 0, %v583
    %v585 = vrot.slane %v580, %v584
    %v588 = vsel %vm72, %v575, 0
    %590 = vmatprep.subr.mxu0 0.0
    %591 = vmatpush1.msra.mxu0 %v576
    %592 = vmatprep.subr.mxu0 0.0
    %593 = vmatpush1.msra.mxu0 %v577
    %594 = vmatprep.subr.mxu0 0.0
    %595 = vmatpush1.msra.mxu0 %v578
    %596 = vmatprep.subr.mxu0 0.0
    %597 = vmatpush1.msra.mxu0 %v579
    %598 = vmatprep.subr.mxu0 0.0
    %599 = vmatpush1.msra.mxu0 0.0
    %600 = vmatprep.subr.mxu0 0.0
    %601 = vmatpush1.msra.mxu0 0.0
    %602 = vmatprep.subr.mxu0 0.0
    %603 = vmatpush1.msra.mxu0 0.0
    %604 = vmatprep.subr.mxu0 0.0
    %605 = vmatpush1.msra.mxu0 0.0
    %606 = vmatprep.subr.mxu0 0.0
    %607 = vmatpush1.msra.mxu0 0.0
    %608 = vmatprep.subr.mxu0 0.0
    %609 = vmatpush1.msra.mxu0 0.0
    %610 = vmatprep.subr.mxu0 0.0
    %611 = vmatpush1.msra.mxu0 0.0
    %612 = vmatprep.subr.mxu0 0.0
    %613 = vmatpush1.msra.mxu0 0.0
    %614 = vmatprep.subr.mxu0 0.0
    %615 = vmatpush1.msra.mxu0 0.0
    %616 = vmatprep.subr.mxu0 0.0
    %617 = vmatpush1.msra.mxu0 0.0
    %618 = vmatprep.subr.mxu0 0.0
    %619 = vmatpush1.msra.mxu0 0.0
    %620 = vmatprep.subr.mxu0 0.0
    %621 = vmatpush1.msra.mxu0 0.0
    %622 = vmatprep.subr.mxu0 0.0
    %623 = vmatpush1.msra.mxu0 0.0
    %624 = vmatprep.subr.mxu0 0.0
    %625 = vmatpush1.msra.mxu0 0.0
    %626 = vmatprep.subr.mxu0 0.0
    %627 = vmatpush1.msra.mxu0 0.0
    %628 = vmatprep.subr.mxu0 0.0
    %629 = vmatpush1.msra.mxu0 0.0
    %630 = vmatprep.subr.mxu0 0.0
    %631 = vmatpush1.msra.mxu0 0.0
    %632 = vmatprep.subr.mxu0 0.0
    %633 = vmatpush1.msra.mxu0 0.0
    %634 = vmatprep.subr.mxu0 0.0
    %635 = vmatpush1.msra.mxu0 0.0
    %636 = vmatprep.subr.mxu0 0.0
    %637 = vmatpush1.msra.mxu0 0.0
    %638 = vmatprep.subr.mxu0 0.0
    %639 = vmatpush1.msra.mxu0 0.0
    %640 = vmatprep.subr.mxu0 0.0
    %641 = vmatpush1.msra.mxu0 0.0
    %642 = vmatprep.subr.mxu0 0.0
    %643 = vmatpush1.msra.mxu0 0.0
    %644 = vmatprep.subr.mxu0 0.0
    %645 = vmatpush1.msra.mxu0 0.0
    %646 = vmatprep.subr.mxu0 0.0
    %647 = vmatpush1.msra.mxu0 0.0
    %648 = vmatprep.subr.mxu0 0.0
    %649 = vmatpush1.msra.mxu0 0.0
    %650 = vmatprep.subr.mxu0 0.0
    %651 = vmatpush1.msra.mxu0 0.0
    %652 = vmatprep.subr.mxu0 0.0
    %653 = vmatpush1.msra.mxu0 0.0
    %654 = vmatprep.mubr.f32.mxu0 0.0
    %655 = vmatmul.mubr.f32.gmra.mrb[0].mxu0 %v588
    %v656 = vpop.f32.mrb[0].mxu0
    %v657 = vadd.f32 %v585, %v656
    %v658 = vpop.f32.mrb[0].mxu0
    %659 = vdwg.mxu0
    %s660 = scalar_lea.vmem %s6, 32
    %v661 = vld [vmem:[%s660] sm:$0xff]
    %v662 = vld [vmem:[%s660 + $0x8] sm:$0xff]
    %v663 = vld [vmem:[%s660 + $0x10] sm:$0xff]
    %v664 = vld [vmem:[%s660 + $0x18] sm:$0xff]
    %s665 = scalar_lea.vmem %s7, 1
    %v666 = vld [vmem:[%s665] sm:$0x1]
    %v668 = vlaneseq
    %v669 = vshrl.u32 %v668, 7
    %v670 = vsub.s32 0, %v669
    %v671 = vrot.slane %v666, %v670
    %673 = vmatprep.subr.mxu0 0.0
    %674 = vmatpush1.msra.mxu0 %v661
    %675 = vmatprep.subr.mxu0 0.0
    %676 = vmatpush1.msra.mxu0 %v662
    %677 = vmatprep.subr.mxu0 0.0
    %678 = vmatpush1.msra.mxu0 %v663
    %679 = vmatprep.subr.mxu0 0.0
    %680 = vmatpush1.msra.mxu0 %v664
    %681 = vmatprep.subr.mxu0 0.0
    %682 = vmatpush1.msra.mxu0 0.0
    %683 = vmatprep.subr.mxu0 0.0
    %684 = vmatpush1.msra.mxu0 0.0
    %685 = vmatprep.subr.mxu0 0.0
    %686 = vmatpush1.msra.mxu0 0.0
    %687 = vmatprep.subr.mxu0 0.0
    %688 = vmatpush1.msra.mxu0 0.0
    %689 = vmatprep.subr.mxu0 0.0
    %690 = vmatpush1.msra.mxu0 0.0
    %691 = vmatprep.subr.mxu0 0.0
    %692 = vmatpush1.msra.mxu0 0.0
    %693 = vmatprep.subr.mxu0 0.0
    %694 = vmatpush1.msra.mxu0 0.0
    %695 = vmatprep.subr.mxu0 0.0
    %696 = vmatpush1.msra.mxu0 0.0
    %697 = vmatprep.subr.mxu0 0.0
    %698 = vmatpush1.msra.mxu0 0.0
    %699 = vmatprep.subr.mxu0 0.0
    %700 = vmatpush1.msra.mxu0 0.0
    %701 = vmatprep.subr.mxu0 0.0
    %702 = vmatpush1.msra.mxu0 0.0
    %703 = vmatprep.subr.mxu0 0.0
    %704 = vmatpush1.msra.mxu0 0.0
    %705 = vmatprep.subr.mxu0 0.0
    %706 = vmatpush1.msra.mxu0 0.0
    %707 = vmatprep.subr.mxu0 0.0
    %708 = vmatpush1.msra.mxu0 0.0
    %709 = vmatprep.subr.mxu0 0.0
    %710 = vmatpush1.msra.mxu0 0.0
    %711 = vmatprep.subr.mxu0 0.0
    %712 = vmatpush1.msra.mxu0 0.0
    %713 = vmatprep.subr.mxu0 0.0
    %714 = vmatpush1.msra.mxu0 0.0
    %715 = vmatprep.subr.mxu0 0.0
    %716 = vmatpush1.msra.mxu0 0.0
    %717 = vmatprep.subr.mxu0 0.0
    %718 = vmatpush1.msra.mxu0 0.0
    %719 = vmatprep.subr.mxu0 0.0
    %720 = vmatpush1.msra.mxu0 0.0
    %721 = vmatprep.subr.mxu0 0.0
    %722 = vmatpush1.msra.mxu0 0.0
    %723 = vmatprep.subr.mxu0 0.0
    %724 = vmatpush1.msra.mxu0 0.0
    %725 = vmatprep.subr.mxu0 0.0
    %726 = vmatpush1.msra.mxu0 0.0
    %727 = vmatprep.subr.mxu0 0.0
    %728 = vmatpush1.msra.mxu0 0.0
    %729 = vmatprep.subr.mxu0 0.0
    %730 = vmatpush1.msra.mxu0 0.0
    %731 = vmatprep.subr.mxu0 0.0
    %732 = vmatpush1.msra.mxu0 0.0
    %733 = vmatprep.subr.mxu0 0.0
    %734 = vmatpush1.msra.mxu0 0.0
    %735 = vmatprep.subr.mxu0 0.0
    %736 = vmatpush1.msra.mxu0 0.0
    %737 = vmatprep.mubr.f32.mxu0 0.0
    %738 = vmatmul.mubr.f32.gmra.mrb[0].mxu0 %v588
    %v739 = vpop.f32.mrb[0].mxu0
    %v740 = vadd.f32 %v671, %v739
    %v741 = vpop.f32.mrb[0].mxu0
    %742 = vdwg.mxu0
    %v743 = vmul.f32 %v657, %v657
    %v744 = vmul.f32 %v740, %v740
    %v745 = vadd.f32 %v743, %v744
    %v746 = vmax.f32 %v745, 1e-08
    %v747 = vrsqrt.pop %v746
    %v748 = vmul.f32 %v657, %v747
    %vm749 = vcmask 64512
    %750 = vst.msk [vmem:[#allocation7] sm:$0xff] %vm749, %v748
    %v751 = vmul.f32 %v740, %v747
    %752 = vst.msk [vmem:[#allocation8] sm:$0xff] %vm749, %v751
    // Predicated region
    $region42: #{tpu_custom_call.1} parent=1 // pred_check
      _
    $region43: #{tpu_custom_call.1} parent=1 // pred_check_branch
      %754 = sbr.rel (0) target = $region45
    $region44: #{tpu_custom_call.1} parent=1 // pred_region
      %s756 = ssub.s32 128, 128
      %757 = vsyncadd [#allocation4], %s756
      %s759 = sshll.u32 [#allocation7], 4
      %s760 = int_to_ptr.vmem [resolvable:$true] %s759
      %762 = dma.vmem_to_hbm [thread:$0]  %s760, 128, %s8, [#allocation4]
    $region45: #{tpu_custom_call.1} parent=1 // pred_fallthru
      _
    // Predicated region
    $region46: #{tpu_custom_call.1} parent=1 // pred_check
      _
    $region47: #{tpu_custom_call.1} parent=1 // pred_check_branch
      %764 = sbr.rel (0) target = $region49
    $region48: #{tpu_custom_call.1} parent=1 // pred_region
      %s766 = ssub.s32 128, 128
      %767 = vsyncadd [#allocation9], %s766
      %s769 = sshll.u32 [#allocation8], 4
      %s770 = int_to_ptr.vmem [resolvable:$true] %s769
      %772 = dma.vmem_to_hbm [thread:$0]  %s770, 128, %s9, [#allocation9]
    $region49: #{tpu_custom_call.1} parent=1 // pred_fallthru
      _
    // Predicated region
    $region50: #{tpu_custom_call.1} parent=1 // pred_check
      _
    $region51: #{tpu_custom_call.1} parent=1 // pred_check_branch
      %774 = sbr.rel (0) target = $region53
    $region52: #{tpu_custom_call.1} parent=1 // pred_region
      %775 = dma.done [#allocation4], 128
    $region53: #{tpu_custom_call.1} parent=1 // pred_fallthru
      _
    // Predicated region
    $region54: #{tpu_custom_call.1} parent=1 // pred_check
      _
    $region55: #{tpu_custom_call.1} parent=1 // pred_check_branch
      %777 = sbr.rel (0) target = $region57
    $region56: #{tpu_custom_call.1} parent=1 // pred_region
      %778 = dma.done [#allocation9], 128
    $region57: #{tpu_custom_call.1} parent=1 // pred_fallthru
      _
    %779 = vsyncpa [#allocation3], 1
    %780 = vsyncpa [#allocation6], 1
    %781 = vsyncpa [#allocation4], 1
    %782 = vsyncpa [#allocation9], 1

</llo_original>
